<compile_context>
chip_gen: v7x
topology: tpu7x:2x2x1
jax: 0.10.0
libtpu: 0.0.40
codegen_flags: <defaults>
</compile_context>

<pallas_src>
import math
from functools import partial

import jax
import jax.numpy as jnp
from jax import lax
from jax.experimental import pallas as pl
from jax.experimental.pallas import tpu as pltpu

BN_EPS = 1e-5

# Conservative VMEM accounting budget that fits all of v5e/v6e/v7x; the explicit
# vmem_limit_bytes below leaves headroom for Mosaic intermediates.
_VMEM_BUDGET_BYTES = 12 * 1024 * 1024
_VMEM_LIMIT_BYTES = 32 * 1024 * 1024


def _transition_kernel(x_ref, scale_ref, shift_ref, wt_ref, b_ref, o_ref, *, mxu_dtype):
    # x_ref:     (4*Cin, TP)       -- 2x2 window position folded into the K axis
    # scale/shift: (4*Cin, 1)      -- folded BN scale/shift, tiled x4 (wrapper)
    # wt_ref:    (Cout_pad8, 4*Cin) -- W^T, pre-scaled by 1/4 (pool divisor), tiled x4
    # b_ref:     (Cout_pad8, 1)
    # o_ref:     (Cout_pad8, TP)   -- pixels on the lane axis -> full-lane stores
    z = jnp.maximum(
        x_ref[...].astype(jnp.float32) * scale_ref[...] + shift_ref[...], 0.0
    )
    acc = jnp.dot(
        wt_ref[...].astype(mxu_dtype),
        z.astype(mxu_dtype),
        preferred_element_type=jnp.float32,
    )
    o_ref[...] = (acc + b_ref[...]).astype(o_ref.dtype)


def _pick_tile_p(p, k_dim, cout_pad, in_itemsize, out_itemsize,
                 vmem_budget_bytes=_VMEM_BUDGET_BYTES):
    """Pixel (lane) tile size: multiple of 128, sized against a VMEM budget that
    includes every double-buffered operand, and capped so large problems get at
    least 2 grid steps (v7x has 2 TensorCores sharding the 'parallel' axis)."""
    # Constant-index operands (scale, shift, W^T, bias) are double-buffered too.
    const_bytes = 2 * (2 * k_dim + cout_pad * k_dim + cout_pad) * 4
    per_col = 2 * (k_dim * in_itemsize + cout_pad * out_itemsize)  # x + out, 2 bufs
    cap = max(128, (vmem_budget_bytes - const_bytes) // max(per_col, 1))
    tile_p = max(128, (min(cap, 4096) // 128) * 128)
    if p >= 2 * 128:  # guarantee >= 2 grid steps when the problem allows it
        half = -(-(-(-p // 2)) // 128) * 128  # round_up(ceil(p/2), 128)
        tile_p = min(tile_p, half)
    p_ceil = -(-p // 128) * 128
    return min(tile_p, p_ceil)


def transition_block(x_nchw, gamma, beta, w, b, *, theta, bn_eps=BN_EPS,
                     mxu_dtype=jnp.float32):
    """x_nchw: (N, Cin, H, W). Returns (N, Cout, H//2, W//2) like the PyTorch module.

    Set mxu_dtype=jnp.bfloat16 on v6e/v7x for native-rate MXU (f32 accumulation);
    default f32 keeps bit-level parity with the reference.
    """
    pool_stride = math.ceil(1.0 / theta)
    # TODO(synk): general pooling stride (ceil(1/theta) != 2) not implemented.
    assert pool_stride == 2, "only theta giving pooling stride == 2 is supported"

    n, cin, h, wd = x_nchw.shape
    assert h % 2 == 0 and wd % 2 == 0, "even spatial dims required for 2x2/s2 pooling"
    cout = w.shape[1]
    ho, wo = h // 2, wd // 2
    p = n * ho * wo
    k_dim = 4 * cin

    # --- BatchNorm2d training-mode batch stats (single pass: E[x^2] - mean^2),
    #     folded into per-channel scale/shift -> kernel is a pure per-pixel map.
    xf = x_nchw.astype(jnp.float32)
    mean = jnp.mean(xf, axis=(0, 2, 3))                      # (Cin,)
    mean_sq = jnp.mean(jnp.square(xf), axis=(0, 2, 3))       # (Cin,)
    var = jnp.maximum(mean_sq - jnp.square(mean), 0.0)
    scale = gamma.astype(jnp.float32) * lax.rsqrt(var + bn_eps)
    shift = beta.astype(jnp.float32) - mean * scale
    # Tile to the (kh,kw,Cin)-flattened K axis: index k*Cin + c -> channel c.
    scale4 = jnp.tile(scale, 4).reshape(k_dim, 1)
    shift4 = jnp.tile(shift, 4).reshape(k_dim, 1)

    # --- Layout: NCHW -> (kh, kw, Cin, N, Ho, Wo) -> (4*Cin, P).  The innermost W
    #     axis stays minor, so this is a near-contiguous copy (no C-to-minor relayout).
    # TODO(synk): for v7x-class HBM this wrapper transpose could be fused into the
    #             kernel with manual strided DMA to save one full read+write of x.
    xk = x_nchw.reshape(n, cin, ho, 2, wo, 2)
    xk = jnp.transpose(xk, (3, 5, 1, 0, 2, 4)).reshape(k_dim, p)

    # --- Cout padded only to a multiple of 8 sublanes (not 128 lanes): pixels are on
    #     the lane axis now, so stores are already full-lane vst.
    cout_pad = max(8, -(-cout // 8) * 8)
    # W^T with the 2x2-pool mean folded in: tile along K (x4) and scale by 1/4.
    wt = jnp.tile(w.astype(jnp.float32).T * 0.25, (1, 4))            # (Cout, 4*Cin)
    wt = jnp.pad(wt, ((0, cout_pad - cout), (0, 0)))
    bp = jnp.pad(b.astype(jnp.float32), (0, cout_pad - cout)).reshape(cout_pad, 1)

    itemsize = x_nchw.dtype.itemsize
    tile_p = _pick_tile_p(p, k_dim, cout_pad, itemsize, itemsize)
    p_pad = -(-p // tile_p) * tile_p
    if p_pad != p:  # pad pixel axis with zero columns; garbage outputs sliced below
        xk = jnp.pad(xk, ((0, 0), (0, p_pad - p)))
    grid = (p_pad // tile_p,)

    out = pl.pallas_call(
        partial(_transition_kernel, mxu_dtype=mxu_dtype),
        out_shape=jax.ShapeDtypeStruct((cout_pad, p_pad), x_nchw.dtype),
        grid=grid,
        in_specs=[
            pl.BlockSpec((k_dim, tile_p), lambda i: (0, i)),
            pl.BlockSpec((k_dim, 1), lambda i: (0, 0)),
            pl.BlockSpec((k_dim, 1), lambda i: (0, 0)),
            pl.BlockSpec((cout_pad, k_dim), lambda i: (0, 0)),
            pl.BlockSpec((cout_pad, 1), lambda i: (0, 0)),
        ],
        out_specs=pl.BlockSpec((cout_pad, tile_p), lambda i: (0, i)),
        compiler_params=pltpu.CompilerParams(
            dimension_semantics=("parallel",),
            vmem_limit_bytes=_VMEM_LIMIT_BYTES,
        ),
    )(xk, scale4, shift4, wt, bp)

    # Small result (Cout x P): slice padding, restore NCHW (Ho/Wo stay minor -> cheap).
    out = out[:cout, :p].reshape(cout, n, ho, wo)
    return jnp.transpose(out, (1, 0, 2, 3))


if __name__ == "__main__":
    # Module hyper-parameters (small, consistent with __init__):
    growth_rate, theta, n_blocks = 4, 0.5, 3
    cin = growth_rate * (n_blocks + 1)   # 16
    cout = growth_rate                   # 4
    N, H, W = 2, 16, 16

    key = jax.random.PRNGKey(0)
    kx, kw, kb, kg, kbe = jax.random.split(key, 5)
    x = jax.random.normal(kx, (N, cin, H, W), jnp.float32)

    # Deterministic synthetic parameters (shapes from the module's __init__).
    bound = 1.0 / math.sqrt(cin)
    w = jax.random.uniform(kw, (cin, cout), jnp.float32, -bound, bound)   # conv 1x1 weight (Cin, Cout)
    b = jax.random.uniform(kb, (cout,), jnp.float32, -bound, bound)       # conv bias
    gamma = 1.0 + 0.1 * jax.random.normal(kg, (cin,), jnp.float32)        # BN weight
    beta = 0.1 * jax.random.normal(kbe, (cin,), jnp.float32)              # BN bias

    out = transition_block(x, gamma, beta, w, b, theta=theta)
    out = jax.block_until_ready(out)

    # Pure-JAX reference (same semantics as the PyTorch forward, training-mode BN).
    mean = x.mean(axis=(0, 2, 3), keepdims=True)
    var = ((x - mean) ** 2).mean(axis=(0, 2, 3), keepdims=True)
    z = (x - mean) / jnp.sqrt(var + BN_EPS) * gamma.reshape(1, -1, 1, 1) + beta.reshape(1, -1, 1, 1)
    z = jnp.maximum(z, 0.0)
    y = jnp.einsum("nchw,cd->ndhw", z, w) + b.reshape(1, -1, 1, 1)
    ref = y.reshape(N, cout, H // 2, 2, W // 2, 2).mean(axis=(3, 5))

    assert out.shape == (N, cout, H // 2, W // 2), out.shape
    assert jnp.allclose(out, ref, atol=1e-4, rtol=1e-4), float(jnp.abs(out - ref).max())
    print("KERNEL_OK")
</pallas_src>

<mosaic_0001>
module attributes {stable_mosaic.version = 11 : i64} {
  func.func @_transition_kernel(%arg0: i32, %arg1: memref<64x128xf32, #tpu.memory_space<vmem>>, %arg2: memref<64x1xf32, #tpu.memory_space<vmem>>, %arg3: memref<64x1xf32, #tpu.memory_space<vmem>>, %arg4: memref<8x64xf32, #tpu.memory_space<vmem>>, %arg5: memref<8x1xf32, #tpu.memory_space<vmem>>, %arg6: memref<8x128xf32, #tpu.memory_space<vmem>>) attributes {dimension_semantics = [#tpu.dimension_semantics<parallel>], iteration_bounds = array<i64: 1>, scalar_prefetch = 0 : i64, scratch_operands = 0 : i64, tpu.core_type = #tpu.core_type<tc>, window_params = [{transform_indices = @transform_0, window_bounds = array<i64: 64, 128>}, {pipeline_mode = #tpu.pipeline_mode<synchronous>, transform_indices = @transform_1, window_bounds = array<i64: 64, 1>}, {pipeline_mode = #tpu.pipeline_mode<synchronous>, transform_indices = @transform_2, window_bounds = array<i64: 64, 1>}, {pipeline_mode = #tpu.pipeline_mode<synchronous>, transform_indices = @transform_3, window_bounds = array<i64: 8, 64>}, {pipeline_mode = #tpu.pipeline_mode<synchronous>, transform_indices = @transform_4, window_bounds = array<i64: 8, 1>}, {transform_indices = @transform_5, window_bounds = array<i64: 8, 128>}]} {
    %c0 = arith.constant 0 : index
    %c0_0 = arith.constant 0 : index
    %0 = vector.load %arg1[%c0, %c0_0] : memref<64x128xf32, #tpu.memory_space<vmem>>, vector<64x128xf32>
    %c0_1 = arith.constant 0 : index
    %c0_2 = arith.constant 0 : index
    %1 = vector.load %arg2[%c0_1, %c0_2] : memref<64x1xf32, #tpu.memory_space<vmem>>, vector<64x1xf32>
    %2 = vector.broadcast %1 : vector<64x1xf32> to vector<64x128xf32>
    %3 = arith.mulf %0, %2 : vector<64x128xf32>
    %c0_3 = arith.constant 0 : index
    %c0_4 = arith.constant 0 : index
    %4 = vector.load %arg3[%c0_3, %c0_4] : memref<64x1xf32, #tpu.memory_space<vmem>>, vector<64x1xf32>
    %5 = vector.broadcast %4 : vector<64x1xf32> to vector<64x128xf32>
    %6 = arith.addf %3, %5 : vector<64x128xf32>
    %cst = arith.constant 0.000000e+00 : f32
    %7 = vector.broadcast %cst : f32 to vector<64x128xf32>
    %8 = arith.maximumf %6, %7 : vector<64x128xf32>
    %c0_5 = arith.constant 0 : index
    %c0_6 = arith.constant 0 : index
    %9 = vector.load %arg4[%c0_5, %c0_6] : memref<8x64xf32, #tpu.memory_space<vmem>>, vector<8x64xf32>
    %cst_7 = arith.constant dense<0.000000e+00> : vector<8x128xf32>
    %10 = tpu.matmul %9, %8, %cst_7 {dimension_numbers = #tpu.dot_dimension_numbers<[1], [0], [0], [1], [0, 0, 1, 1], [], []>} : vector<8x64xf32>, vector<64x128xf32>, vector<8x128xf32> -> vector<8x128xf32>
    %c0_8 = arith.constant 0 : index
    %c0_9 = arith.constant 0 : index
    %11 = vector.load %arg5[%c0_8, %c0_9] : memref<8x1xf32, #tpu.memory_space<vmem>>, vector<8x1xf32>
    %12 = vector.broadcast %11 : vector<8x1xf32> to vector<8x128xf32>
    %13 = arith.addf %10, %12 : vector<8x128xf32>
    %c0_10 = arith.constant 0 : index
    %c0_11 = arith.constant 0 : index
    %14 = vector.load %arg6[%c0_10, %c0_11] : memref<8x128xf32, #tpu.memory_space<vmem>>, vector<8x128xf32>
    tpu.vector_store %arg6[%c0_10, %c0_11], %13 {strides = array<i32>} : memref<8x128xf32, #tpu.memory_space<vmem>>, vector<8x128xf32>,
    return
  }
  func.func @transform_0(%arg0: i32) -> (i32, i32) {
    %c0_i32 = arith.constant 0 : i32
    %c0_i32_0 = arith.constant 0 : i32
    return %c0_i32, %arg0 : i32, i32
  }
  func.func @transform_1(%arg0: i32) -> (i32, i32) {
    %c0_i32 = arith.constant 0 : i32
    %c0_i32_0 = arith.constant 0 : i32
    %c0_i32_1 = arith.constant 0 : i32
    return %c0_i32, %c0_i32_0 : i32, i32
  }
  func.func @transform_2(%arg0: i32) -> (i32, i32) {
    %c0_i32 = arith.constant 0 : i32
    %c0_i32_0 = arith.constant 0 : i32
    %c0_i32_1 = arith.constant 0 : i32
    return %c0_i32, %c0_i32_0 : i32, i32
  }
  func.func @transform_3(%arg0: i32) -> (i32, i32) {
    %c0_i32 = arith.constant 0 : i32
    %c0_i32_0 = arith.constant 0 : i32
    %c0_i32_1 = arith.constant 0 : i32
    return %c0_i32, %c0_i32_0 : i32, i32
  }
  func.func @transform_4(%arg0: i32) -> (i32, i32) {
    %c0_i32 = arith.constant 0 : i32
    %c0_i32_0 = arith.constant 0 : i32
    %c0_i32_1 = arith.constant 0 : i32
    return %c0_i32, %c0_i32_0 : i32, i32
  }
  func.func @transform_5(%arg0: i32) -> (i32, i32) {
    %c0_i32 = arith.constant 0 : i32
    %c0_i32_0 = arith.constant 0 : i32
    return %c0_i32, %arg0 : i32, i32
  }
}

</mosaic_0001>

<llo_original>
// kernel: tpu_custom_call.1
$region0: #{tpu_custom_call.1}
  #allocation0 [shape = 'u32[]', space=smem, size = 0x4, offset = 0x4, fixed_abs, tag = 'smem constant byte address 0x4 - core index']
  #allocation1 [shape = 'u32[144,128]{1,0:T(1,128)}', space=vmem, size = 0x12000, scoped, tag = 'internal scratch']
  %s0 = inlined_call_operand.vmem [shape: f32[64,128], index: 0, kind: input, shape index: {}]
  %s1 = inlined_call_operand.vmem [shape: f32[64,1], index: 1, kind: input, shape index: {}]
  %s2 = inlined_call_operand.vmem [shape: f32[64,1], index: 2, kind: input, shape index: {}]
  %s3 = inlined_call_operand.vmem [shape: f32[8,64], index: 3, kind: input, shape index: {}]
  %s4 = inlined_call_operand.vmem [shape: f32[8,1], index: 4, kind: input, shape index: {}]
  %s5 = inlined_call_operand.hbm [shape: f32[8,128], index: 5, kind: output, shape index: {}]
  %s6 = sld [smem:[#allocation0]]
  $region30: #{tpu_custom_call.1} parent=0
    _
  %s8 = ssub.s32 1, %s6
  %s9 = scalar_select 0, %s8, %s6
  $region1: #{tpu_custom_call.1} parent=0
    #allocation2 [shape = 'u8[4096]{0}', space=vmem, size = 0x1000, scoped, tag = 'output window, operand 0, single buffered']
    #allocation3 [shape = 's32[1]{0}', space=sflag, size = 0x4, scoped, tag = 'scoped memory for tpu_custom_call.1']
    %10 = vsyncpa [#allocation3], 0
    // Predicated region
    $region2: #{tpu_custom_call.1} parent=1 // pred_check
      _
    $region3: #{tpu_custom_call.1} parent=1 // pred_check_branch
      %12 = sbr.rel (0) target = $region5
    $region4: #{tpu_custom_call.1} parent=1 // pred_region
      _
    $region5: #{tpu_custom_call.1} parent=1 // pred_fallthru
      _
    // Predicated region
    $region6: #{tpu_custom_call.1} parent=1 // pred_check
      _
    $region7: #{tpu_custom_call.1} parent=1 // pred_check_branch
      %14 = sbr.rel (0) target = $region9
    $region8: #{tpu_custom_call.1} parent=1 // pred_region
      _
    $region9: #{tpu_custom_call.1} parent=1 // pred_fallthru
      _
    // Predicated region
    $region10: #{tpu_custom_call.1} parent=1 // pred_check
      _
    $region11: #{tpu_custom_call.1} parent=1 // pred_check_branch
      %16 = sbr.rel (0) target = $region13
    $region12: #{tpu_custom_call.1} parent=1 // pred_region
      _
    $region13: #{tpu_custom_call.1} parent=1 // pred_fallthru
      _
    // Predicated region
    $region14: #{tpu_custom_call.1} parent=1 // pred_check
      _
    $region15: #{tpu_custom_call.1} parent=1 // pred_check_branch
      %18 = sbr.rel (0) target = $region17
    $region16: #{tpu_custom_call.1} parent=1 // pred_region
      _
    $region17: #{tpu_custom_call.1} parent=1 // pred_fallthru
      _
    // Predicated region
    $region18: #{tpu_custom_call.1} parent=1 // pred_check
      _
    $region19: #{tpu_custom_call.1} parent=1 // pred_check_branch
      %20 = sbr.rel (0) target = $region21
    $region20: #{tpu_custom_call.1} parent=1 // pred_region
      _
    $region21: #{tpu_custom_call.1} parent=1 // pred_fallthru
      _
    %v21 = vld [vmem:[%s0] sm:$0xff]
    %v22 = vld [vmem:[%s0 + $0x8] sm:$0xff]
    %v23 = vld [vmem:[%s0 + $0x10] sm:$0xff]
    %v24 = vld [vmem:[%s0 + $0x18] sm:$0xff]
    %v25 = vld [vmem:[%s0 + $0x20] sm:$0xff]
    %v26 = vld [vmem:[%s0 + $0x28] sm:$0xff]
    %v27 = vld [vmem:[%s0 + $0x30] sm:$0xff]
    %v28 = vld [vmem:[%s0 + $0x38] sm:$0xff]
    %v29 = vld [vmem:[%s1] sm:$0xff]
    %v30 = vld [vmem:[%s1 + $0x8] sm:$0xff]
    %v31 = vld [vmem:[%s1 + $0x10] sm:$0xff]
    %v32 = vld [vmem:[%s1 + $0x18] sm:$0xff]
    %v33 = vld [vmem:[%s1 + $0x20] sm:$0xff]
    %v34 = vld [vmem:[%s1 + $0x28] sm:$0xff]
    %v35 = vld [vmem:[%s1 + $0x30] sm:$0xff]
    %v36 = vld [vmem:[%s1 + $0x38] sm:$0xff]
    %38 = vset.pattern.permute.xlu0 0
    %39 = vperm.xlu0 %38, %v29
    %v40 = vpop.permute.xlu0 %39
    %43 = vset.pattern.permute.xlu0 0
    %44 = vperm.xlu0 %43, %v30
    %v45 = vpop.permute.xlu0 %44
    %48 = vset.pattern.permute.xlu0 0
    %49 = vperm.xlu0 %48, %v31
    %v50 = vpop.permute.xlu0 %49
    %53 = vset.pattern.permute.xlu0 0
    %54 = vperm.xlu0 %53, %v32
    %v55 = vpop.permute.xlu0 %54
    %58 = vset.pattern.permute.xlu0 0
    %59 = vperm.xlu0 %58, %v33
    %v60 = vpop.permute.xlu0 %59
    %63 = vset.pattern.permute.xlu0 0
    %64 = vperm.xlu0 %63, %v34
    %v65 = vpop.permute.xlu0 %64
    %68 = vset.pattern.permute.xlu0 0
    %69 = vperm.xlu0 %68, %v35
    %v70 = vpop.permute.xlu0 %69
    %73 = vset.pattern.permute.xlu0 0
    %74 = vperm.xlu0 %73, %v36
    %v75 = vpop.permute.xlu0 %74
    %v77 = vmul.f32 %v21, %v40
    %v78 = vmul.f32 %v22, %v45
    %v79 = vmul.f32 %v23, %v50
    %v80 = vmul.f32 %v24, %v55
    %v81 = vmul.f32 %v25, %v60
    %v82 = vmul.f32 %v26, %v65
    %v83 = vmul.f32 %v27, %v70
    %v84 = vmul.f32 %v28, %v75
    %v85 = vld [vmem:[%s2] sm:$0xff]
    %v86 = vld [vmem:[%s2 + $0x8] sm:$0xff]
    %v87 = vld [vmem:[%s2 + $0x10] sm:$0xff]
    %v88 = vld [vmem:[%s2 + $0x18] sm:$0xff]
    %v89 = vld [vmem:[%s2 + $0x20] sm:$0xff]
    %v90 = vld [vmem:[%s2 + $0x28] sm:$0xff]
    %v91 = vld [vmem:[%s2 + $0x30] sm:$0xff]
    %v92 = vld [vmem:[%s2 + $0x38] sm:$0xff]
    %94 = vset.pattern.permute.xlu0 0
    %95 = vperm.xlu0 %94, %v85
    %v96 = vpop.permute.xlu0 %95
    %99 = vset.pattern.permute.xlu0 0
    %100 = vperm.xlu0 %99, %v86
    %v101 = vpop.permute.xlu0 %100
    %104 = vset.pattern.permute.xlu0 0
    %105 = vperm.xlu0 %104, %v87
    %v106 = vpop.permute.xlu0 %105
    %109 = vset.pattern.permute.xlu0 0
    %110 = vperm.xlu0 %109, %v88
    %v111 = vpop.permute.xlu0 %110
    %114 = vset.pattern.permute.xlu0 0
    %115 = vperm.xlu0 %114, %v89
    %v116 = vpop.permute.xlu0 %115
    %119 = vset.pattern.permute.xlu0 0
    %120 = vperm.xlu0 %119, %v90
    %v121 = vpop.permute.xlu0 %120
    %124 = vset.pattern.permute.xlu0 0
    %125 = vperm.xlu0 %124, %v91
    %v126 = vpop.permute.xlu0 %125
    %129 = vset.pattern.permute.xlu0 0
    %130 = vperm.xlu0 %129, %v92
    %v131 = vpop.permute.xlu0 %130
    %v133 = vadd.f32 %v77, %v96
    %v134 = vadd.f32 %v78, %v101
    %v135 = vadd.f32 %v79, %v106
    %v136 = vadd.f32 %v80, %v111
    %v137 = vadd.f32 %v81, %v116
    %v138 = vadd.f32 %v82, %v121
    %v139 = vadd.f32 %v83, %v126
    %v140 = vadd.f32 %v84, %v131
    %v141 = vmax.f32 %v133, 0.0
    %v142 = vmax.f32 %v134, 0.0
    %v143 = vmax.f32 %v135, 0.0
    %v144 = vmax.f32 %v136, 0.0
    %v145 = vmax.f32 %v137, 0.0
    %v146 = vmax.f32 %v138, 0.0
    %v147 = vmax.f32 %v139, 0.0
    %v148 = vmax.f32 %v140, 0.0
    %v149 = vld [vmem:[%s3] sm:$0xff]
    %v150 = vld [vmem:[%s4] sm:$0xff]
    %152 = vset.pattern.permute.xlu0 0
    %153 = vperm.xlu0 %152, %v150
    %v154 = vpop.permute.xlu0 %153
    %vm156 = vcmask 523264
    %v158 = vsel %vm156, %v149, 0
    %160 = vmatprep.subr.mxu0 0.0
    %161 = vmatpush1.msra.mxu0 %v141
    %162 = vmatprep.subr.mxu0 0.0
    %163 = vmatpush1.msra.mxu0 %v142
    %164 = vmatprep.subr.mxu0 0.0
    %165 = vmatpush1.msra.mxu0 %v143
    %166 = vmatprep.subr.mxu0 0.0
    %167 = vmatpush1.msra.mxu0 %v144
    %168 = vmatprep.subr.mxu0 0.0
    %169 = vmatpush1.msra.mxu0 %v145
    %170 = vmatprep.subr.mxu0 0.0
    %171 = vmatpush1.msra.mxu0 %v146
    %172 = vmatprep.subr.mxu0 0.0
    %173 = vmatpush1.msra.mxu0 %v147
    %174 = vmatprep.subr.mxu0 0.0
    %175 = vmatpush1.msra.mxu0 %v148
    %176 = vmatprep.subr.mxu0 0.0
    %177 = vmatpush1.msra.mxu0 0.0
    %178 = vmatprep.subr.mxu0 0.0
    %179 = vmatpush1.msra.mxu0 0.0
    %180 = vmatprep.subr.mxu0 0.0
    %181 = vmatpush1.msra.mxu0 0.0
    %182 = vmatprep.subr.mxu0 0.0
    %183 = vmatpush1.msra.mxu0 0.0
    %184 = vmatprep.subr.mxu0 0.0
    %185 = vmatpush1.msra.mxu0 0.0
    %186 = vmatprep.subr.mxu0 0.0
    %187 = vmatpush1.msra.mxu0 0.0
    %188 = vmatprep.subr.mxu0 0.0
    %189 = vmatpush1.msra.mxu0 0.0
    %190 = vmatprep.subr.mxu0 0.0
    %191 = vmatpush1.msra.mxu0 0.0
    %192 = vmatprep.subr.mxu0 0.0
    %193 = vmatpush1.msra.mxu0 0.0
    %194 = vmatprep.subr.mxu0 0.0
    %195 = vmatpush1.msra.mxu0 0.0
    %196 = vmatprep.subr.mxu0 0.0
    %197 = vmatpush1.msra.mxu0 0.0
    %198 = vmatprep.subr.mxu0 0.0
    %199 = vmatpush1.msra.mxu0 0.0
    %200 = vmatprep.subr.mxu0 0.0
    %201 = vmatpush1.msra.mxu0 0.0
    %202 = vmatprep.subr.mxu0 0.0
    %203 = vmatpush1.msra.mxu0 0.0
    %204 = vmatprep.subr.mxu0 0.0
    %205 = vmatpush1.msra.mxu0 0.0
    %206 = vmatprep.subr.mxu0 0.0
    %207 = vmatpush1.msra.mxu0 0.0
    %208 = vmatprep.subr.mxu0 0.0
    %209 = vmatpush1.msra.mxu0 0.0
    %210 = vmatprep.subr.mxu0 0.0
    %211 = vmatpush1.msra.mxu0 0.0
    %212 = vmatprep.subr.mxu0 0.0
    %213 = vmatpush1.msra.mxu0 0.0
    %214 = vmatprep.subr.mxu0 0.0
    %215 = vmatpush1.msra.mxu0 0.0
    %216 = vmatprep.subr.mxu0 0.0
    %217 = vmatpush1.msra.mxu0 0.0
    %218 = vmatprep.subr.mxu0 0.0
    %219 = vmatpush1.msra.mxu0 0.0
    %220 = vmatprep.subr.mxu0 0.0
    %221 = vmatpush1.msra.mxu0 0.0
    %222 = vmatprep.subr.mxu0 0.0
    %223 = vmatpush1.msra.mxu0 0.0
    %224 = vmatprep.mubr.f32.mxu0 0.0
    %225 = vmatmul.mubr.f32.gmra.mrb[0].mxu0 %v158
    %v226 = vpop.f32.mrb[0].mxu0
    %v227 = vadd.f32 %v154, %v226
    %v228 = vpop.f32.mrb[0].mxu0
    %229 = vdwg.mxu0
    %230 = vst [vmem:[#allocation2] sm:$0xff] %v227
    // Predicated region
    $region22: #{tpu_custom_call.1} parent=1 // pred_check
      _
    $region23: #{tpu_custom_call.1} parent=1 // pred_check_branch
      %232 = sbr.rel (0) target = $region25
    $region24: #{tpu_custom_call.1} parent=1 // pred_region
      %s234 = ssub.s32 128, 128
      %235 = vsyncadd [#allocation3], %s234
      %s237 = sshll.u32 [#allocation2], 4
      %s238 = int_to_ptr.vmem [resolvable:$true] %s237
      %240 = dma.vmem_to_hbm [thread:$0]  %s238, 128, %s5, [#allocation3]
    $region25: #{tpu_custom_call.1} parent=1 // pred_fallthru
      _
    // Predicated region
    $region26: #{tpu_custom_call.1} parent=1 // pred_check
      _
    $region27: #{tpu_custom_call.1} parent=1 // pred_check_branch
      %242 = sbr.rel (0) target = $region29
    $region28: #{tpu_custom_call.1} parent=1 // pred_region
      %243 = dma.done [#allocation3], 128
    $region29: #{tpu_custom_call.1} parent=1 // pred_fallthru
      _
    %244 = vsyncpa [#allocation3], 1

</llo_original>
